<compile_context>
chip_gen: v6e
topology: v6e:2x2x1
jax: 0.10.0
libtpu: 0.0.40
codegen_flags: <defaults>
</compile_context>

<pallas_src>
import jax
import jax.numpy as jnp
from jax.experimental import pallas as pl
from jax.experimental.pallas import tpu as pltpu

_LANE = 128
_ROW = 16        # batch-tile granularity (bf16 sublane packing is (16, 128))
_TB_MAX = 1024   # max rows per grid step


def _round_up(x, m):
    return (x + m - 1) // m * m


def _cdiv(a, b):
    return (a + b - 1) // b


def _make_qfunc_kernel(num_layers):
    """Kernel signature: (obs_ref, w0, b0, ..., w{L-1}, b{L-1}, q_ref).

    ReLU after every hidden layer, Identity on the output layer. bf16 MXU
    operands, f32 accumulation.
    """

    def kernel(*refs):
        obs_ref = refs[0]
        q_ref = refs[-1]
        h = obs_ref[...]                                   # bf16 [tb, in_pad]
        for j in range(num_layers):
            w_ref = refs[1 + 2 * j]
            b_ref = refs[2 + 2 * j]
            acc = jnp.dot(h, w_ref[...], preferred_element_type=jnp.float32)
            acc = acc + b_ref[...].astype(jnp.float32)     # (1, out) broadcast
            if j < num_layers - 1:
                # ReLU, then back to bf16: bf16-native next matmul and half the
                # inter-layer activation footprint in VMEM.
                h = jnp.maximum(acc, 0.0).astype(jnp.bfloat16)
            else:
                q_ref[...] = acc.astype(q_ref.dtype)       # Identity output act
    return kernel


def _build_in_specs(obs_block, params, single_buffer_weights):
    in_specs = [pl.BlockSpec(obs_block, lambda i: (i, 0))]
    for w, b in params:
        if single_buffer_weights:
            # Grid-invariant blocks: one VMEM buffer is enough (loaded once,
            # never re-fetched) -- halves the resident weight footprint.
            in_specs.append(pl.BlockSpec(w.shape, lambda i: (0, 0),
                                         pipeline_mode=pl.Buffered(1)))
            in_specs.append(pl.BlockSpec(b.shape, lambda i: (0, 0),
                                         pipeline_mode=pl.Buffered(1)))
        else:
            in_specs.append(pl.BlockSpec(w.shape, lambda i: (0, 0)))
            in_specs.append(pl.BlockSpec(b.shape, lambda i: (0, 0)))
    return in_specs


def mlp_q_function(obs, params, act_dim):
    """Pallas forward pass of MLPQFunction. Returns q of shape [B, act_dim] f32."""
    B, obs_dim = obs.shape
    num_layers = len(params)
    in_pad = params[0][0].shape[0]    # lane-padded obs width
    a_pad = params[-1][0].shape[1]    # lane-padded output width

    # Padding-aware batch tiling; >= 2 grid steps when possible (v7x megacore).
    b_ceil = _round_up(max(B, 1), _ROW)
    if b_ceil <= _TB_MAX:
        n_steps = 2 if b_ceil > _ROW else 1
    else:
        n_steps = _cdiv(b_ceil, _TB_MAX)
    tb = _round_up(_cdiv(B, n_steps), _ROW)
    b_pad = tb * n_steps

    obs_p = obs
    if b_pad != B or in_pad != obs_dim:
        obs_p = jnp.pad(obs, ((0, b_pad - B), (0, in_pad - obs_dim)))
    obs_p = obs_p.astype(jnp.bfloat16)   # bf16 MXU operand

    flat_params = [t for wb in params for t in wb]
    kernel = _make_qfunc_kernel(num_layers)

    def run(single_buffer_weights):
        return pl.pallas_call(
            kernel,
            out_shape=jax.ShapeDtypeStruct((b_pad, a_pad), jnp.float32),
            grid=(n_steps,),
            in_specs=_build_in_specs((tb, in_pad), params, single_buffer_weights),
            out_specs=pl.BlockSpec((tb, a_pad), lambda i: (i, 0)),
            compiler_params=pltpu.CompilerParams(
                dimension_semantics=("parallel",),
                vmem_limit_bytes=48 * 1024 * 1024,
            ),
        )(obs_p, *flat_params)

    try:
        q_pad = run(True)
    except Exception:
        # Some jax versions may reject Buffered(1); fall back to defaults.
        q_pad = run(False)

    return q_pad[:B, :act_dim]


def init_params(key, obs_dim, act_dim, hidden_sizes, dtype=jnp.bfloat16):
    """PyTorch-nn.Linear-style init (uniform +/- 1/sqrt(fan_in)).

    Weights stored [in, out]; obs/hidden/output dims zero-padded to multiples
    of 128 lanes. Stored in bf16 (MXU-native). Returns list of (w, b) tuples.
    """
    logical = [obs_dim] + list(hidden_sizes) + [act_dim]
    padded = [_round_up(s, _LANE) for s in logical]
    params = []
    for j in range(len(logical) - 1):
        key, wk, bk = jax.random.split(key, 3)
        fan_in = logical[j]
        scale = 1.0 / float(fan_in) ** 0.5
        w = jax.random.uniform(wk, (logical[j], logical[j + 1]), jnp.float32,
                               minval=-scale, maxval=scale)
        b = jax.random.uniform(bk, (1, logical[j + 1]), jnp.float32,
                               minval=-scale, maxval=scale)
        w_pad = jnp.zeros((padded[j], padded[j + 1]), jnp.float32)
        w_pad = w_pad.at[:logical[j], :logical[j + 1]].set(w)
        b_pad = jnp.zeros((1, padded[j + 1]), jnp.float32)
        b_pad = b_pad.at[:, :logical[j + 1]].set(b)
        params.append((w_pad.astype(dtype), b_pad.astype(dtype)))
    return params


if __name__ == "__main__":
    # Small shapes consistent with the module's forward.
    batch, obs_dim, act_dim = 2, 16, 8
    hidden_sizes = (32, 32)

    key = jax.random.PRNGKey(0)
    key, obs_key, param_key = jax.random.split(key, 3)
    obs = jax.random.normal(obs_key, (batch, obs_dim), dtype=jnp.float32)
    params = init_params(param_key, obs_dim, act_dim, hidden_sizes)

    q = mlp_q_function(obs, params, act_dim)
    jax.block_until_ready(q)

    # Pure-JAX f32 reference using the same (padded, bf16-stored) parameters.
    h = obs
    for j, (w, b) in enumerate(params):
        w32 = w.astype(jnp.float32)
        b32 = b.astype(jnp.float32)
        if j == 0:
            w32 = w32[:obs_dim]
        h = h @ w32 + b32
        if j < len(params) - 1:
            h = jnp.maximum(h, 0.0)
    q_ref = h[:, :act_dim]

    assert q.shape == (batch, act_dim) and q.dtype == jnp.float32
    # bf16 MXU operands -> looser tolerance than a pure-f32 forward.
    assert bool(jnp.allclose(q, q_ref, atol=2e-2, rtol=2e-2)), (
        f"max abs err {float(jnp.max(jnp.abs(q - q_ref)))}")

    print("KERNEL_OK")
</pallas_src>

<mosaic_0001>
module attributes {stable_mosaic.version = 11 : i64} {
  func.func @kernel(%arg0: i32, %arg1: memref<16x128xbf16, #tpu.memory_space<vmem>>, %arg2: memref<128x128xbf16, #tpu.memory_space<vmem>>, %arg3: memref<1x128xbf16, #tpu.memory_space<vmem>>, %arg4: memref<128x128xbf16, #tpu.memory_space<vmem>>, %arg5: memref<1x128xbf16, #tpu.memory_space<vmem>>, %arg6: memref<128x128xbf16, #tpu.memory_space<vmem>>, %arg7: memref<1x128xbf16, #tpu.memory_space<vmem>>, %arg8: memref<16x128xf32, #tpu.memory_space<vmem>>) attributes {dimension_semantics = [#tpu.dimension_semantics<parallel>], iteration_bounds = array<i64: 1>, scalar_prefetch = 0 : i64, scratch_operands = 0 : i64, tpu.core_type = #tpu.core_type<tc>, window_params = [{transform_indices = @transform_0, window_bounds = array<i64: 16, 128>}, {pipeline_mode = #tpu.pipeline_mode<synchronous>, transform_indices = @transform_1, window_bounds = array<i64: 128, 128>}, {pipeline_mode = #tpu.pipeline_mode<synchronous>, transform_indices = @transform_2, window_bounds = array<i64: 1, 128>}, {pipeline_mode = #tpu.pipeline_mode<synchronous>, transform_indices = @transform_3, window_bounds = array<i64: 128, 128>}, {pipeline_mode = #tpu.pipeline_mode<synchronous>, transform_indices = @transform_4, window_bounds = array<i64: 1, 128>}, {pipeline_mode = #tpu.pipeline_mode<synchronous>, transform_indices = @transform_5, window_bounds = array<i64: 128, 128>}, {pipeline_mode = #tpu.pipeline_mode<synchronous>, transform_indices = @transform_6, window_bounds = array<i64: 1, 128>}, {transform_indices = @transform_7, window_bounds = array<i64: 16, 128>}]} {
    %c0 = arith.constant 0 : index
    %c0_0 = arith.constant 0 : index
    %0 = vector.load %arg1[%c0, %c0_0] : memref<16x128xbf16, #tpu.memory_space<vmem>>, vector<16x128xbf16>
    %c0_1 = arith.constant 0 : index
    %c0_2 = arith.constant 0 : index
    %1 = vector.load %arg2[%c0_1, %c0_2] : memref<128x128xbf16, #tpu.memory_space<vmem>>, vector<128x128xbf16>
    %cst = arith.constant dense<0.000000e+00> : vector<16x128xf32>
    %2 = tpu.matmul %0, %1, %cst {dimension_numbers = #tpu.dot_dimension_numbers<[1], [0], [0], [1], [0, 0, 1, 1], [], []>} : vector<16x128xbf16>, vector<128x128xbf16>, vector<16x128xf32> -> vector<16x128xf32>
    %c0_3 = arith.constant 0 : index
    %c0_4 = arith.constant 0 : index
    %3 = vector.load %arg3[%c0_3, %c0_4] : memref<1x128xbf16, #tpu.memory_space<vmem>>, vector<1x128xbf16>
    %4 = arith.extf %3 : vector<1x128xbf16> to vector<1x128xf32>
    %5 = vector.broadcast %4 : vector<1x128xf32> to vector<16x128xf32>
    %6 = arith.addf %2, %5 : vector<16x128xf32>
    %cst_5 = arith.constant 0.000000e+00 : f32
    %7 = vector.broadcast %cst_5 : f32 to vector<16x128xf32>
    %8 = arith.maximumf %6, %7 : vector<16x128xf32>
    %9 = arith.truncf %8 : vector<16x128xf32> to vector<16x128xbf16>
    %c0_6 = arith.constant 0 : index
    %c0_7 = arith.constant 0 : index
    %10 = vector.load %arg4[%c0_6, %c0_7] : memref<128x128xbf16, #tpu.memory_space<vmem>>, vector<128x128xbf16>
    %cst_8 = arith.constant dense<0.000000e+00> : vector<16x128xf32>
    %11 = tpu.matmul %9, %10, %cst_8 {dimension_numbers = #tpu.dot_dimension_numbers<[1], [0], [0], [1], [0, 0, 1, 1], [], []>} : vector<16x128xbf16>, vector<128x128xbf16>, vector<16x128xf32> -> vector<16x128xf32>
    %c0_9 = arith.constant 0 : index
    %c0_10 = arith.constant 0 : index
    %12 = vector.load %arg5[%c0_9, %c0_10] : memref<1x128xbf16, #tpu.memory_space<vmem>>, vector<1x128xbf16>
    %13 = arith.extf %12 : vector<1x128xbf16> to vector<1x128xf32>
    %14 = vector.broadcast %13 : vector<1x128xf32> to vector<16x128xf32>
    %15 = arith.addf %11, %14 : vector<16x128xf32>
    %cst_11 = arith.constant 0.000000e+00 : f32
    %16 = vector.broadcast %cst_11 : f32 to vector<16x128xf32>
    %17 = arith.maximumf %15, %16 : vector<16x128xf32>
    %18 = arith.truncf %17 : vector<16x128xf32> to vector<16x128xbf16>
    %c0_12 = arith.constant 0 : index
    %c0_13 = arith.constant 0 : index
    %19 = vector.load %arg6[%c0_12, %c0_13] : memref<128x128xbf16, #tpu.memory_space<vmem>>, vector<128x128xbf16>
    %cst_14 = arith.constant dense<0.000000e+00> : vector<16x128xf32>
    %20 = tpu.matmul %18, %19, %cst_14 {dimension_numbers = #tpu.dot_dimension_numbers<[1], [0], [0], [1], [0, 0, 1, 1], [], []>} : vector<16x128xbf16>, vector<128x128xbf16>, vector<16x128xf32> -> vector<16x128xf32>
    %c0_15 = arith.constant 0 : index
    %c0_16 = arith.constant 0 : index
    %21 = vector.load %arg7[%c0_15, %c0_16] : memref<1x128xbf16, #tpu.memory_space<vmem>>, vector<1x128xbf16>
    %22 = arith.extf %21 : vector<1x128xbf16> to vector<1x128xf32>
    %23 = vector.broadcast %22 : vector<1x128xf32> to vector<16x128xf32>
    %24 = arith.addf %20, %23 : vector<16x128xf32>
    %c0_17 = arith.constant 0 : index
    %c0_18 = arith.constant 0 : index
    %25 = vector.load %arg8[%c0_17, %c0_18] : memref<16x128xf32, #tpu.memory_space<vmem>>, vector<16x128xf32>
    tpu.vector_store %arg8[%c0_17, %c0_18], %24 {strides = array<i32>} : memref<16x128xf32, #tpu.memory_space<vmem>>, vector<16x128xf32>,
    return
  }
  func.func @transform_0(%arg0: i32) -> (i32, i32) {
    %c0_i32 = arith.constant 0 : i32
    %c0_i32_0 = arith.constant 0 : i32
    return %arg0, %c0_i32 : i32, i32
  }
  func.func @transform_1(%arg0: i32) -> (i32, i32) {
    %c0_i32 = arith.constant 0 : i32
    %c0_i32_0 = arith.constant 0 : i32
    %c0_i32_1 = arith.constant 0 : i32
    return %c0_i32, %c0_i32_0 : i32, i32
  }
  func.func @transform_2(%arg0: i32) -> (i32, i32) {
    %c0_i32 = arith.constant 0 : i32
    %c0_i32_0 = arith.constant 0 : i32
    %c0_i32_1 = arith.constant 0 : i32
    return %c0_i32, %c0_i32_0 : i32, i32
  }
  func.func @transform_3(%arg0: i32) -> (i32, i32) {
    %c0_i32 = arith.constant 0 : i32
    %c0_i32_0 = arith.constant 0 : i32
    %c0_i32_1 = arith.constant 0 : i32
    return %c0_i32, %c0_i32_0 : i32, i32
  }
  func.func @transform_4(%arg0: i32) -> (i32, i32) {
    %c0_i32 = arith.constant 0 : i32
    %c0_i32_0 = arith.constant 0 : i32
    %c0_i32_1 = arith.constant 0 : i32
    return %c0_i32, %c0_i32_0 : i32, i32
  }
  func.func @transform_5(%arg0: i32) -> (i32, i32) {
    %c0_i32 = arith.constant 0 : i32
    %c0_i32_0 = arith.constant 0 : i32
    %c0_i32_1 = arith.constant 0 : i32
    return %c0_i32, %c0_i32_0 : i32, i32
  }
  func.func @transform_6(%arg0: i32) -> (i32, i32) {
    %c0_i32 = arith.constant 0 : i32
    %c0_i32_0 = arith.constant 0 : i32
    %c0_i32_1 = arith.constant 0 : i32
    return %c0_i32, %c0_i32_0 : i32, i32
  }
  func.func @transform_7(%arg0: i32) -> (i32, i32) {
    %c0_i32 = arith.constant 0 : i32
    %c0_i32_0 = arith.constant 0 : i32
    return %arg0, %c0_i32 : i32, i32
  }
}

module attributes {stable_mosaic.version = 11 : i64} {
  func.func @kernel(%arg0: i32, %arg1: memref<16x128xbf16, #tpu.memory_space<vmem>>, %arg2: memref<128x128xbf16, #tpu.memory_space<vmem>>, %arg3: memref<1x128xbf16, #tpu.memory_space<vmem>>, %arg4: memref<128x128xbf16, #tpu.memory_space<vmem>>, %arg5: memref<1x128xbf16, #tpu.memory_space<vmem>>, %arg6: memref<128x128xbf16, #tpu.memory_space<vmem>>, %arg7: memref<1x128xbf16, #tpu.memory_space<vmem>>, %arg8: memref<16x128xf32, #tpu.memory_space<vmem>>) attributes {dimension_semantics = [#tpu.dimension_semantics<parallel>], iteration_bounds = array<i64: 1>, scalar_prefetch = 0 : i64, scratch_operands = 0 : i64, tpu.core_type = #tpu.core_type<tc>, window_params = [{transform_indices = @transform_0, window_bounds = array<i64: 16, 128>}, {pipeline_mode = #tpu.pipeline_mode<synchronous>, transform_indices = @transform_1, window_bounds = array<i64: 128, 128>}, {pipeline_mode = #tpu.pipeline_mode<synchronous>, transform_indices = @transform_2, window_bounds = array<i64: 1, 128>}, {pipeline_mode = #tpu.pipeline_mode<synchronous>, transform_indices = @transform_3, window_bounds = array<i64: 128, 128>}, {pipeline_mode = #tpu.pipeline_mode<synchronous>, transform_indices = @transform_4, window_bounds = array<i64: 1, 128>}, {pipeline_mode = #tpu.pipeline_mode<synchronous>, transform_indices = @transform_5, window_bounds = array<i64: 128, 128>}, {pipeline_mode = #tpu.pipeline_mode<synchronous>, transform_indices = @transform_6, window_bounds = array<i64: 1, 128>}, {transform_indices = @transform_7, window_bounds = array<i64: 16, 128>}]} {
    %c0 = arith.constant 0 : index
    %c0_0 = arith.constant 0 : index
    %0 = vector.load %arg1[%c0, %c0_0] : memref<16x128xbf16, #tpu.memory_space<vmem>>, vector<16x128xbf16>
    %c0_1 = arith.constant 0 : index
    %c0_2 = arith.constant 0 : index
    %1 = vector.load %arg2[%c0_1, %c0_2] : memref<128x128xbf16, #tpu.memory_space<vmem>>, vector<128x128xbf16>
    %cst = arith.constant dense<0.000000e+00> : vector<16x128xf32>
    %2 = tpu.matmul %0, %1, %cst {dimension_numbers = #tpu.dot_dimension_numbers<[1], [0], [0], [1], [0, 0, 1, 1], [], []>} : vector<16x128xbf16>, vector<128x128xbf16>, vector<16x128xf32> -> vector<16x128xf32>
    %c0_3 = arith.constant 0 : index
    %c0_4 = arith.constant 0 : index
    %3 = vector.load %arg3[%c0_3, %c0_4] : memref<1x128xbf16, #tpu.memory_space<vmem>>, vector<1x128xbf16>
    %4 = arith.extf %3 : vector<1x128xbf16> to vector<1x128xf32>
    %5 = vector.broadcast %4 : vector<1x128xf32> to vector<16x128xf32>
    %6 = arith.addf %2, %5 : vector<16x128xf32>
    %cst_5 = arith.constant 0.000000e+00 : f32
    %7 = vector.broadcast %cst_5 : f32 to vector<16x128xf32>
    %8 = arith.maximumf %6, %7 : vector<16x128xf32>
    %9 = arith.truncf %8 : vector<16x128xf32> to vector<16x128xbf16>
    %c0_6 = arith.constant 0 : index
    %c0_7 = arith.constant 0 : index
    %10 = vector.load %arg4[%c0_6, %c0_7] : memref<128x128xbf16, #tpu.memory_space<vmem>>, vector<128x128xbf16>
    %cst_8 = arith.constant dense<0.000000e+00> : vector<16x128xf32>
    %11 = tpu.matmul %9, %10, %cst_8 {dimension_numbers = #tpu.dot_dimension_numbers<[1], [0], [0], [1], [0, 0, 1, 1], [], []>} : vector<16x128xbf16>, vector<128x128xbf16>, vector<16x128xf32> -> vector<16x128xf32>
    %c0_9 = arith.constant 0 : index
    %c0_10 = arith.constant 0 : index
    %12 = vector.load %arg5[%c0_9, %c0_10] : memref<1x128xbf16, #tpu.memory_space<vmem>>, vector<1x128xbf16>
    %13 = arith.extf %12 : vector<1x128xbf16> to vector<1x128xf32>
    %14 = vector.broadcast %13 : vector<1x128xf32> to vector<16x128xf32>
    %15 = arith.addf %11, %14 : vector<16x128xf32>
    %cst_11 = arith.constant 0.000000e+00 : f32
    %16 = vector.broadcast %cst_11 : f32 to vector<16x128xf32>
    %17 = arith.maximumf %15, %16 : vector<16x128xf32>
    %18 = arith.truncf %17 : vector<16x128xf32> to vector<16x128xbf16>
    %c0_12 = arith.constant 0 : index
    %c0_13 = arith.constant 0 : index
    %19 = vector.load %arg6[%c0_12, %c0_13] : memref<128x128xbf16, #tpu.memory_space<vmem>>, vector<128x128xbf16>
    %cst_14 = arith.constant dense<0.000000e+00> : vector<16x128xf32>
    %20 = tpu.matmul %18, %19, %cst_14 {dimension_numbers = #tpu.dot_dimension_numbers<[1], [0], [0], [1], [0, 0, 1, 1], [], []>} : vector<16x128xbf16>, vector<128x128xbf16>, vector<16x128xf32> -> vector<16x128xf32>
    %c0_15 = arith.constant 0 : index
    %c0_16 = arith.constant 0 : index
    %21 = vector.load %arg7[%c0_15, %c0_16] : memref<1x128xbf16, #tpu.memory_space<vmem>>, vector<1x128xbf16>
    %22 = arith.extf %21 : vector<1x128xbf16> to vector<1x128xf32>
    %23 = vector.broadcast %22 : vector<1x128xf32> to vector<16x128xf32>
    %24 = arith.addf %20, %23 : vector<16x128xf32>
    %c0_17 = arith.constant 0 : index
    %c0_18 = arith.constant 0 : index
    %25 = vector.load %arg8[%c0_17, %c0_18] : memref<16x128xf32, #tpu.memory_space<vmem>>, vector<16x128xf32>
    tpu.vector_store %arg8[%c0_17, %c0_18], %24 {strides = array<i32>} : memref<16x128xf32, #tpu.memory_space<vmem>>, vector<16x128xf32>,
    return
  }
  func.func @transform_0(%arg0: i32) -> (i32, i32) {
    %c0_i32 = arith.constant 0 : i32
    %c0_i32_0 = arith.constant 0 : i32
    return %arg0, %c0_i32 : i32, i32
  }
  func.func @transform_1(%arg0: i32) -> (i32, i32) {
    %c0_i32 = arith.constant 0 : i32
    %c0_i32_0 = arith.constant 0 : i32
    %c0_i32_1 = arith.constant 0 : i32
    return %c0_i32, %c0_i32_0 : i32, i32
  }
  func.func @transform_2(%arg0: i32) -> (i32, i32) {
    %c0_i32 = arith.constant 0 : i32
    %c0_i32_0 = arith.constant 0 : i32
    %c0_i32_1 = arith.constant 0 : i32
    return %c0_i32, %c0_i32_0 : i32, i32
  }
  func.func @transform_3(%arg0: i32) -> (i32, i32) {
    %c0_i32 = arith.constant 0 : i32
    %c0_i32_0 = arith.constant 0 : i32
    %c0_i32_1 = arith.constant 0 : i32
    return %c0_i32, %c0_i32_0 : i32, i32
  }
  func.func @transform_4(%arg0: i32) -> (i32, i32) {
    %c0_i32 = arith.constant 0 : i32
    %c0_i32_0 = arith.constant 0 : i32
    %c0_i32_1 = arith.constant 0 : i32
    return %c0_i32, %c0_i32_0 : i32, i32
  }
  func.func @transform_5(%arg0: i32) -> (i32, i32) {
    %c0_i32 = arith.constant 0 : i32
    %c0_i32_0 = arith.constant 0 : i32
    %c0_i32_1 = arith.constant 0 : i32
    return %c0_i32, %c0_i32_0 : i32, i32
  }
  func.func @transform_6(%arg0: i32) -> (i32, i32) {
    %c0_i32 = arith.constant 0 : i32
    %c0_i32_0 = arith.constant 0 : i32
    %c0_i32_1 = arith.constant 0 : i32
    return %c0_i32, %c0_i32_0 : i32, i32
  }
  func.func @transform_7(%arg0: i32) -> (i32, i32) {
    %c0_i32 = arith.constant 0 : i32
    %c0_i32_0 = arith.constant 0 : i32
    return %arg0, %c0_i32 : i32, i32
  }
}

</mosaic_0001>

<llo_original>
// kernel: tpu_custom_call.1
$region0: #{tpu_custom_call.1}
  #allocation0 [shape = 'u32[]', space=smem, size = 0x4, offset = 0x4, fixed_abs, tag = 'smem constant byte address 0x4 - core index']
  #allocation1 [shape = 'u32[144,128]{1,0:T(1,128)}', space=vmem, size = 0x12000, scoped, tag = 'internal scratch']
  %s0 = inlined_call_operand.hbm [shape: bf16[16,128], index: 0, kind: input, shape index: {}]
  %s1 = inlined_call_operand.hbm [shape: bf16[128,128], index: 1, kind: input, shape index: {}]
  %s2 = inlined_call_operand.vmem [shape: bf16[1,128], index: 2, kind: input, shape index: {}]
  %s3 = inlined_call_operand.hbm [shape: bf16[128,128], index: 3, kind: input, shape index: {}]
  %s4 = inlined_call_operand.vmem [shape: bf16[1,128], index: 4, kind: input, shape index: {}]
  %s5 = inlined_call_operand.hbm [shape: bf16[128,128], index: 5, kind: input, shape index: {}]
  %s6 = inlined_call_operand.vmem [shape: bf16[1,128], index: 6, kind: input, shape index: {}]
  %s7 = inlined_call_operand.hbm [shape: f32[16,128], index: 7, kind: output, shape index: {}]
  %s8 = sld [smem:[#allocation0]]
  $region54: #{tpu_custom_call.1} parent=0
    _
  %s10 = ssub.s32 1, %s8
  %s11 = scalar_select 0, %s10, %s8
  $region1: #{tpu_custom_call.1} parent=0
    #allocation2 [shape = 'u8[4096]{0}', space=vmem, size = 0x1000, scoped, tag = 'input window, operand 0, single buffered']
    #allocation3 [shape = 's32[1]{0}', space=sflag, size = 0x4, scoped, tag = 'scoped memory for tpu_custom_call.1']
    #allocation4 [shape = 's32[1]{0}', space=sflag, size = 0x4, scoped, tag = 'scoped memory for tpu_custom_call.1']
    #allocation5 [shape = 'u8[32768]{0}', space=vmem, size = 0x8000, scoped, tag = 'input window, operand 1, single buffered']
    #allocation6 [shape = 's32[1]{0}', space=sflag, size = 0x4, scoped, tag = 'scoped memory for tpu_custom_call.1']
    #allocation7 [shape = 'u8[32768]{0}', space=vmem, size = 0x8000, scoped, tag = 'input window, operand 3, single buffered']
    #allocation8 [shape = 'u8[32768]{0}', space=vmem, size = 0x8000, scoped, tag = 'input window, operand 5, single buffered']
    #allocation9 [shape = 's32[1]{0}', space=sflag, size = 0x4, scoped, tag = 'scoped memory for tpu_custom_call.1']
    #allocation10 [shape = 'u8[8192]{0}', space=vmem, size = 0x2000, scoped, tag = 'output window, operand 0, single buffered']
    %12 = vsyncpa [#allocation3], 0
    %13 = vsyncpa [#allocation6], 0
    %14 = vsyncpa [#allocation9], 0
    %15 = vsyncpa [#allocation4], 0
    // Predicated region
    $region2: #{tpu_custom_call.1} parent=1 // pred_check
      _
    $region3: #{tpu_custom_call.1} parent=1 // pred_check_branch
      %17 = sbr.rel (0) target = $region5
    $region4: #{tpu_custom_call.1} parent=1 // pred_region
      %s19 = ssub.s32 128, 128
      %20 = vsyncadd [#allocation3], %s19
      %s21 = sshll.u32 [#allocation2], 4
      %s22 = int_to_ptr.vmem [resolvable:$true] %s21
      %27 = dma.hbm_to_vmem [thread:$0]  %s0, 128, %s22, [#allocation3], 64, 64, 4
    $region5: #{tpu_custom_call.1} parent=1 // pred_fallthru
      _
    // Predicated region
    $region6: #{tpu_custom_call.1} parent=1 // pred_check
      _
    $region7: #{tpu_custom_call.1} parent=1 // pred_check_branch
      %29 = sbr.rel (0) target = $region9
    $region8: #{tpu_custom_call.1} parent=1 // pred_region
      %s31 = ssub.s32 1024, 1024
      %32 = vsyncadd [#allocation6], %s31
      %s33 = sshll.u32 [#allocation5], 4
      %s34 = int_to_ptr.vmem [resolvable:$true] %s33
      %39 = dma.hbm_to_vmem [thread:$0]  %s1, 1024, %s34, [#allocation6], 64, 64, 4
    $region9: #{tpu_custom_call.1} parent=1 // pred_fallthru
      _
    // Predicated region
    $region10: #{tpu_custom_call.1} parent=1 // pred_check
      _
    $region11: #{tpu_custom_call.1} parent=1 // pred_check_branch
      %41 = sbr.rel (0) target = $region13
    $region12: #{tpu_custom_call.1} parent=1 // pred_region
      _
    $region13: #{tpu_custom_call.1} parent=1 // pred_fallthru
      _
    // Predicated region
    $region14: #{tpu_custom_call.1} parent=1 // pred_check
      _
    $region15: #{tpu_custom_call.1} parent=1 // pred_check_branch
      %43 = sbr.rel (0) target = $region17
    $region16: #{tpu_custom_call.1} parent=1 // pred_region
      %s45 = ssub.s32 1024, 1024
      %46 = vsyncadd [#allocation6], %s45
      %s47 = sshll.u32 [#allocation7], 4
      %s48 = int_to_ptr.vmem [resolvable:$true] %s47
      %53 = dma.hbm_to_vmem [thread:$0]  %s3, 1024, %s48, [#allocation6], 64, 64, 4
    $region17: #{tpu_custom_call.1} parent=1 // pred_fallthru
      _
    // Predicated region
    $region18: #{tpu_custom_call.1} parent=1 // pred_check
      _
    $region19: #{tpu_custom_call.1} parent=1 // pred_check_branch
      %55 = sbr.rel (0) target = $region21
    $region20: #{tpu_custom_call.1} parent=1 // pred_region
      _
    $region21: #{tpu_custom_call.1} parent=1 // pred_fallthru
      _
    // Predicated region
    $region22: #{tpu_custom_call.1} parent=1 // pred_check
      _
    $region23: #{tpu_custom_call.1} parent=1 // pred_check_branch
      %57 = sbr.rel (0) target = $region25
    $region24: #{tpu_custom_call.1} parent=1 // pred_region
      %s59 = ssub.s32 1024, 1024
      %60 = vsyncadd [#allocation9], %s59
      %s61 = sshll.u32 [#allocation8], 4
      %s62 = int_to_ptr.vmem [resolvable:$true] %s61
      %67 = dma.hbm_to_vmem [thread:$0]  %s5, 1024, %s62, [#allocation9], 64, 64, 4
    $region25: #{tpu_custom_call.1} parent=1 // pred_fallthru
      _
    // Predicated region
    $region26: #{tpu_custom_call.1} parent=1 // pred_check
      _
    $region27: #{tpu_custom_call.1} parent=1 // pred_check_branch
      %69 = sbr.rel (0) target = $region29
    $region28: #{tpu_custom_call.1} parent=1 // pred_region
      _
    $region29: #{tpu_custom_call.1} parent=1 // pred_fallthru
      _
    // Predicated region
    $region30: #{tpu_custom_call.1} parent=1 // pred_check
      _
    $region31: #{tpu_custom_call.1} parent=1 // pred_check_branch
      %71 = sbr.rel (0) target = $region33
    $region32: #{tpu_custom_call.1} parent=1 // pred_region
      %72 = dma.done [#allocation3], 128
    $region33: #{tpu_custom_call.1} parent=1 // pred_fallthru
      _
    // Predicated region
    $region34: #{tpu_custom_call.1} parent=1 // pred_check
      _
    $region35: #{tpu_custom_call.1} parent=1 // pred_check_branch
      %74 = sbr.rel (0) target = $region37
    $region36: #{tpu_custom_call.1} parent=1 // pred_region
      %75 = dma.done [#allocation6], 1024
    $region37: #{tpu_custom_call.1} parent=1 // pred_fallthru
      _
    // Predicated region
    $region38: #{tpu_custom_call.1} parent=1 // pred_check
      _
    $region39: #{tpu_custom_call.1} parent=1 // pred_check_branch
      %77 = sbr.rel (0) target = $region41
    $region40: #{tpu_custom_call.1} parent=1 // pred_region
      %78 = dma.done [#allocation6], 1024
    $region41: #{tpu_custom_call.1} parent=1 // pred_fallthru
      _
    // Predicated region
    $region42: #{tpu_custom_call.1} parent=1 // pred_check
      _
    $region43: #{tpu_custom_call.1} parent=1 // pred_check_branch
      %80 = sbr.rel (0) target = $region45
    $region44: #{tpu_custom_call.1} parent=1 // pred_region
      %81 = dma.done [#allocation9], 1024
    $region45: #{tpu_custom_call.1} parent=1 // pred_fallthru
      _
    %v83 = vld [vmem:[#allocation2] sm:$0xf]
    %v84 = vld [vmem:[#allocation2 + $0x4] sm:$0xf]
    %v85 = vld [vmem:[#allocation5] sm:$0xf]
    %v86 = vld [vmem:[#allocation5 + $0x4] sm:$0xf]
    %v87 = vld [vmem:[#allocation5 + $0x8] sm:$0xf]
    %v88 = vld [vmem:[#allocation5 + $0xc] sm:$0xf]
    %v89 = vld [vmem:[#allocation5 + $0x10] sm:$0xf]
    %v90 = vld [vmem:[#allocation5 + $0x14] sm:$0xf]
    %v91 = vld [vmem:[#allocation5 + $0x18] sm:$0xf]
    %v92 = vld [vmem:[#allocation5 + $0x1c] sm:$0xf]
    %v93 = vld [vmem:[#allocation5 + $0x20] sm:$0xf]
    %v94 = vld [vmem:[#allocation5 + $0x24] sm:$0xf]
    %v95 = vld [vmem:[#allocation5 + $0x28] sm:$0xf]
    %v96 = vld [vmem:[#allocation5 + $0x2c] sm:$0xf]
    %v97 = vld [vmem:[#allocation5 + $0x30] sm:$0xf]
    %v98 = vld [vmem:[#allocation5 + $0x34] sm:$0xf]
    %v99 = vld [vmem:[#allocation5 + $0x38] sm:$0xf]
    %v100 = vld [vmem:[#allocation5 + $0x3c] sm:$0xf]
    %v101 = vld [vmem:[%s2] sm:$0x1]
    %v102 = vunpack.c.l.bf16 %v101
    %v103 = vlaneseq
    %v104 = vshrl.u32 %v103, 7
    %v105 = vsub.s32 0, %v104
    %v106 = vrot.slane %v102, %v105
    %v109 = vunpack.c.l.b16 %v83
    %v110 = vunpack.c.l.b16 %v84
    %v111 = vpack.c.b16 %v110, %v109
    %v129 = vunpack.c.l.b16 %v85
    %v130 = vunpack.c.l.b16 %v86
    %v131 = vunpack.c.l.b16 %v87
    %v132 = vunpack.c.l.b16 %v88
    %v133 = vunpack.c.l.b16 %v89
    %v134 = vunpack.c.l.b16 %v90
    %v135 = vunpack.c.l.b16 %v91
    %v136 = vunpack.c.l.b16 %v92
    %v137 = vunpack.c.l.b16 %v93
    %v138 = vunpack.c.l.b16 %v94
    %v139 = vunpack.c.l.b16 %v95
    %v140 = vunpack.c.l.b16 %v96
    %v141 = vunpack.c.l.b16 %v97
    %v142 = vunpack.c.l.b16 %v98
    %v143 = vunpack.c.l.b16 %v99
    %v144 = vunpack.c.l.b16 %v100
    %v145 = vpack.c.b16 %v130, %v129
    %v146 = vpack.c.b16 %v132, %v131
    %v147 = vpack.c.b16 %v134, %v133
    %v148 = vpack.c.b16 %v136, %v135
    %v149 = vpack.c.b16 %v138, %v137
    %v150 = vpack.c.b16 %v140, %v139
    %v151 = vpack.c.b16 %v142, %v141
    %v152 = vpack.c.b16 %v144, %v143
    %161 = vmatprep.subr.bf16.mxu0 0
    %162 = vmatpush1.bf16.msra.mxu0 %v152
    %163 = vmatprep.subr.bf16.mxu0 0
    %164 = vmatpush1.bf16.msra.mxu0 %v151
    %165 = vmatprep.subr.bf16.mxu0 0
    %166 = vmatpush1.bf16.msra.mxu0 %v150
    %167 = vmatprep.subr.bf16.mxu0 0
    %168 = vmatpush1.bf16.msra.mxu0 %v149
    %169 = vmatprep.subr.bf16.mxu0 0
    %170 = vmatpush1.bf16.msra.mxu0 %v148
    %171 = vmatprep.subr.bf16.mxu0 0
    %172 = vmatpush1.bf16.msra.mxu0 %v147
    %173 = vmatprep.subr.bf16.mxu0 0
    %174 = vmatpush1.bf16.msra.mxu0 %v146
    %175 = vmatprep.subr.bf16.mxu0 0
    %176 = vmatpush1.bf16.msra.mxu0 %v145
    %177 = vmatprep.subr.bf16.mxu0 0
    %178 = vmatpush2.bf16.msra.mxu0 0
    %179 = vmatprep.subr.bf16.mxu0 0
    %180 = vmatpush2.bf16.msra.mxu0 0
    %181 = vmatprep.subr.bf16.mxu0 0
    %182 = vmatpush2.bf16.msra.mxu0 0
    %183 = vmatprep.subr.bf16.mxu0 0
    %184 = vmatpush2.bf16.msra.mxu0 0
    %185 = vmatprep.subr.bf16.mxu0 0
    %186 = vmatpush2.bf16.msra.mxu0 0
    %187 = vmatprep.subr.bf16.mxu0 0
    %188 = vmatpush2.bf16.msra.mxu0 0
    %189 = vmatprep.subr.bf16.mxu0 0
    %190 = vmatpush2.bf16.msra.mxu0 0
    %191 = vmatprep.subr.bf16.mxu0 0
    %192 = vmatpush2.bf16.msra.mxu0 0
    %193 = vmatprep.mubr.bf16.mxu0 0
    %194 = vmatmul.mubr.bf16.gmra.mxu0 %v111
    %v195 = vpop.f32.mrf.mxu0
    %v196 = vadd.f32 %v106, %v195
    %v197 = vpop.f32.mrf.mxu0
    %v198 = vpop.f32.mrf.mxu0
    %v199 = vadd.f32 %v106, %v198
    %v200 = vpop.f32.mrf.mxu0
    %201 = vdwg.mxu0
    %v202 = vmax.f32 %v196, 0.0
    %v203 = vmax.f32 %v199, 0.0
    %v204 = vpack.c.bf16 %v203, %v202
    %v205 = vld [vmem:[#allocation7] sm:$0xf]
    %v206 = vld [vmem:[#allocation7 + $0x4] sm:$0xf]
    %v207 = vld [vmem:[#allocation7 + $0x8] sm:$0xf]
    %v208 = vld [vmem:[#allocation7 + $0xc] sm:$0xf]
    %v209 = vld [vmem:[#allocation7 + $0x10] sm:$0xf]
    %v210 = vld [vmem:[#allocation7 + $0x14] sm:$0xf]
    %v211 = vld [vmem:[#allocation7 + $0x18] sm:$0xf]
    %v212 = vld [vmem:[#allocation7 + $0x1c] sm:$0xf]
    %v213 = vld [vmem:[#allocation7 + $0x20] sm:$0xf]
    %v214 = vld [vmem:[#allocation7 + $0x24] sm:$0xf]
    %v215 = vld [vmem:[#allocation7 + $0x28] sm:$0xf]
    %v216 = vld [vmem:[#allocation7 + $0x2c] sm:$0xf]
    %v217 = vld [vmem:[#allocation7 + $0x30] sm:$0xf]
    %v218 = vld [vmem:[#allocation7 + $0x34] sm:$0xf]
    %v219 = vld [vmem:[#allocation7 + $0x38] sm:$0xf]
    %v220 = vld [vmem:[#allocation7 + $0x3c] sm:$0xf]
    %v221 = vld [vmem:[%s4] sm:$0x1]
    %v222 = vunpack.c.l.bf16 %v221
    %v223 = vlaneseq
    %v224 = vshrl.u32 %v223, 7
    %v225 = vsub.s32 0, %v224
    %v226 = vrot.slane %v222, %v225
    %v243 = vunpack.c.l.b16 %v205
    %v244 = vunpack.c.l.b16 %v206
    %v245 = vunpack.c.l.b16 %v207
    %v246 = vunpack.c.l.b16 %v208
    %v247 = vunpack.c.l.b16 %v209
    %v248 = vunpack.c.l.b16 %v210
    %v249 = vunpack.c.l.b16 %v211
    %v250 = vunpack.c.l.b16 %v212
    %v251 = vunpack.c.l.b16 %v213
    %v252 = vunpack.c.l.b16 %v214
    %v253 = vunpack.c.l.b16 %v215
    %v254 = vunpack.c.l.b16 %v216
    %v255 = vunpack.c.l.b16 %v217
    %v256 = vunpack.c.l.b16 %v218
    %v257 = vunpack.c.l.b16 %v219
    %v258 = vunpack.c.l.b16 %v220
    %v259 = vpack.c.b16 %v244, %v243
    %v260 = vpack.c.b16 %v246, %v245
    %v261 = vpack.c.b16 %v248, %v247
    %v262 = vpack.c.b16 %v250, %v249
    %v263 = vpack.c.b16 %v252, %v251
    %v264 = vpack.c.b16 %v254, %v253
    %v265 = vpack.c.b16 %v256, %v255
    %v266 = vpack.c.b16 %v258, %v257
    %275 = vmatprep.subr.bf16.mxu0 0
    %276 = vmatpush1.bf16.msra.mxu0 %v266
    %277 = vmatprep.subr.bf16.mxu0 0
    %278 = vmatpush1.bf16.msra.mxu0 %v265
    %279 = vmatprep.subr.bf16.mxu0 0
    %280 = vmatpush1.bf16.msra.mxu0 %v264
    %281 = vmatprep.subr.bf16.mxu0 0
    %282 = vmatpush1.bf16.msra.mxu0 %v263
    %283 = vmatprep.subr.bf16.mxu0 0
    %284 = vmatpush1.bf16.msra.mxu0 %v262
    %285 = vmatprep.subr.bf16.mxu0 0
    %286 = vmatpush1.bf16.msra.mxu0 %v261
    %287 = vmatprep.subr.bf16.mxu0 0
    %288 = vmatpush1.bf16.msra.mxu0 %v260
    %289 = vmatprep.subr.bf16.mxu0 0
    %290 = vmatpush1.bf16.msra.mxu0 %v259
    %291 = vmatprep.subr.bf16.mxu0 0
    %292 = vmatpush2.bf16.msra.mxu0 0
    %293 = vmatprep.subr.bf16.mxu0 0
    %294 = vmatpush2.bf16.msra.mxu0 0
    %295 = vmatprep.subr.bf16.mxu0 0
    %296 = vmatpush2.bf16.msra.mxu0 0
    %297 = vmatprep.subr.bf16.mxu0 0
    %298 = vmatpush2.bf16.msra.mxu0 0
    %299 = vmatprep.subr.bf16.mxu0 0
    %300 = vmatpush2.bf16.msra.mxu0 0
    %301 = vmatprep.subr.bf16.mxu0 0
    %302 = vmatpush2.bf16.msra.mxu0 0
    %303 = vmatprep.subr.bf16.mxu0 0
    %304 = vmatpush2.bf16.msra.mxu0 0
    %305 = vmatprep.subr.bf16.mxu0 0
    %306 = vmatpush2.bf16.msra.mxu0 0
    %307 = vmatprep.mubr.bf16.mxu0 0
    %308 = vmatmul.mubr.bf16.gmra.mxu0 %v204
    %v309 = vpop.f32.mrf.mxu0
    %v310 = vadd.f32 %v226, %v309
    %v311 = vpop.f32.mrf.mxu0
    %v312 = vpop.f32.mrf.mxu0
    %v313 = vadd.f32 %v226, %v312
    %v314 = vpop.f32.mrf.mxu0
    %315 = vdwg.mxu0
    %v316 = vmax.f32 %v310, 0.0
    %v317 = vmax.f32 %v313, 0.0
    %v318 = vpack.c.bf16 %v317, %v316
    %v319 = vld [vmem:[#allocation8] sm:$0xf]
    %v320 = vld [vmem:[#allocation8 + $0x4] sm:$0xf]
    %v321 = vld [vmem:[#allocation8 + $0x8] sm:$0xf]
    %v322 = vld [vmem:[#allocation8 + $0xc] sm:$0xf]
    %v323 = vld [vmem:[#allocation8 + $0x10] sm:$0xf]
    %v324 = vld [vmem:[#allocation8 + $0x14] sm:$0xf]
    %v325 = vld [vmem:[#allocation8 + $0x18] sm:$0xf]
    %v326 = vld [vmem:[#allocation8 + $0x1c] sm:$0xf]
    %v327 = vld [vmem:[#allocation8 + $0x20] sm:$0xf]
    %v328 = vld [vmem:[#allocation8 + $0x24] sm:$0xf]
    %v329 = vld [vmem:[#allocation8 + $0x28] sm:$0xf]
    %v330 = vld [vmem:[#allocation8 + $0x2c] sm:$0xf]
    %v331 = vld [vmem:[#allocation8 + $0x30] sm:$0xf]
    %v332 = vld [vmem:[#allocation8 + $0x34] sm:$0xf]
    %v333 = vld [vmem:[#allocation8 + $0x38] sm:$0xf]
    %v334 = vld [vmem:[#allocation8 + $0x3c] sm:$0xf]
    %v335 = vld [vmem:[%s6] sm:$0x1]
    %v336 = vunpack.c.l.bf16 %v335
    %v337 = vlaneseq
    %v338 = vshrl.u32 %v337, 7
    %v339 = vsub.s32 0, %v338
    %v340 = vrot.slane %v336, %v339
    %v357 = vunpack.c.l.b16 %v319
    %v358 = vunpack.c.l.b16 %v320
    %v359 = vunpack.c.l.b16 %v321
    %v360 = vunpack.c.l.b16 %v322
    %v361 = vunpack.c.l.b16 %v323
    %v362 = vunpack.c.l.b16 %v324
    %v363 = vunpack.c.l.b16 %v325
    %v364 = vunpack.c.l.b16 %v326
    %v365 = vunpack.c.l.b16 %v327
    %v366 = vunpack.c.l.b16 %v328
    %v367 = vunpack.c.l.b16 %v329
    %v368 = vunpack.c.l.b16 %v330
    %v369 = vunpack.c.l.b16 %v331
    %v370 = vunpack.c.l.b16 %v332
    %v371 = vunpack.c.l.b16 %v333
    %v372 = vunpack.c.l.b16 %v334
    %v373 = vpack.c.b16 %v358, %v357
    %v374 = vpack.c.b16 %v360, %v359
    %v375 = vpack.c.b16 %v362, %v361
    %v376 = vpack.c.b16 %v364, %v363
    %v377 = vpack.c.b16 %v366, %v365
    %v378 = vpack.c.b16 %v368, %v367
    %v379 = vpack.c.b16 %v370, %v369
    %v380 = vpack.c.b16 %v372, %v371
    %389 = vmatprep.subr.bf16.mxu0 0
    %390 = vmatpush1.bf16.msra.mxu0 %v380
    %391 = vmatprep.subr.bf16.mxu0 0
    %392 = vmatpush1.bf16.msra.mxu0 %v379
    %393 = vmatprep.subr.bf16.mxu0 0
    %394 = vmatpush1.bf16.msra.mxu0 %v378
    %395 = vmatprep.subr.bf16.mxu0 0
    %396 = vmatpush1.bf16.msra.mxu0 %v377
    %397 = vmatprep.subr.bf16.mxu0 0
    %398 = vmatpush1.bf16.msra.mxu0 %v376
    %399 = vmatprep.subr.bf16.mxu0 0
    %400 = vmatpush1.bf16.msra.mxu0 %v375
    %401 = vmatprep.subr.bf16.mxu0 0
    %402 = vmatpush1.bf16.msra.mxu0 %v374
    %403 = vmatprep.subr.bf16.mxu0 0
    %404 = vmatpush1.bf16.msra.mxu0 %v373
    %405 = vmatprep.subr.bf16.mxu0 0
    %406 = vmatpush2.bf16.msra.mxu0 0
    %407 = vmatprep.subr.bf16.mxu0 0
    %408 = vmatpush2.bf16.msra.mxu0 0
    %409 = vmatprep.subr.bf16.mxu0 0
    %410 = vmatpush2.bf16.msra.mxu0 0
    %411 = vmatprep.subr.bf16.mxu0 0
    %412 = vmatpush2.bf16.msra.mxu0 0
    %413 = vmatprep.subr.bf16.mxu0 0
    %414 = vmatpush2.bf16.msra.mxu0 0
    %415 = vmatprep.subr.bf16.mxu0 0
    %416 = vmatpush2.bf16.msra.mxu0 0
    %417 = vmatprep.subr.bf16.mxu0 0
    %418 = vmatpush2.bf16.msra.mxu0 0
    %419 = vmatprep.subr.bf16.mxu0 0
    %420 = vmatpush2.bf16.msra.mxu0 0
    %421 = vmatprep.mubr.bf16.mxu0 0
    %422 = vmatmul.mubr.bf16.gmra.mxu0 %v318
    %v423 = vpop.f32.mrf.mxu0
    %v424 = vadd.f32 %v340, %v423
    %v425 = vpop.f32.mrf.mxu0
    %v426 = vpop.f32.mrf.mxu0
    %v427 = vadd.f32 %v340, %v426
    %v428 = vpop.f32.mrf.mxu0
    %429 = vdwg.mxu0
    %430 = vst [vmem:[#allocation10] sm:$0xff] %v424
    %431 = vst [vmem:[#allocation10 + $0x8] sm:$0xff] %v427
    // Predicated region
    $region46: #{tpu_custom_call.1} parent=1 // pred_check
      _
    $region47: #{tpu_custom_call.1} parent=1 // pred_check_branch
      %433 = sbr.rel (0) target = $region49
    $region48: #{tpu_custom_call.1} parent=1 // pred_region
      %s435 = ssub.s32 256, 256
      %436 = vsyncadd [#allocation4], %s435
      %s437 = sshll.u32 [#allocation10], 4
      %s438 = int_to_ptr.vmem [resolvable:$true] %s437
      %443 = dma.vmem_to_hbm [thread:$0]  %s438, 256, %s7, [#allocation4], 128, 128, 8
    $region49: #{tpu_custom_call.1} parent=1 // pred_fallthru
      _
    // Predicated region
    $region50: #{tpu_custom_call.1} parent=1 // pred_check
      _
    $region51: #{tpu_custom_call.1} parent=1 // pred_check_branch
      %445 = sbr.rel (0) target = $region53
    $region52: #{tpu_custom_call.1} parent=1 // pred_region
      %446 = dma.done [#allocation4], 256
    $region53: #{tpu_custom_call.1} parent=1 // pred_fallthru
      _
    %447 = vsyncpa [#allocation3], 1
    %448 = vsyncpa [#allocation6], 1
    %449 = vsyncpa [#allocation9], 1
    %450 = vsyncpa [#allocation4], 1

// kernel: tpu_custom_call.1
$region0: #{tpu_custom_call.1}
  #allocation0 [shape = 'u32[]', space=smem, size = 0x4, offset = 0x4, fixed_abs, tag = 'smem constant byte address 0x4 - core index']
  #allocation1 [shape = 'u32[144,128]{1,0:T(1,128)}', space=vmem, size = 0x12000, scoped, tag = 'internal scratch']
  %s0 = inlined_call_operand.hbm [shape: bf16[16,128], index: 0, kind: input, shape index: {}]
  %s1 = inlined_call_operand.hbm [shape: bf16[128,128], index: 1, kind: input, shape index: {}]
  %s2 = inlined_call_operand.vmem [shape: bf16[1,128], index: 2, kind: input, shape index: {}]
  %s3 = inlined_call_operand.hbm [shape: bf16[128,128], index: 3, kind: input, shape index: {}]
  %s4 = inlined_call_operand.vmem [shape: bf16[1,128], index: 4, kind: input, shape index: {}]
  %s5 = inlined_call_operand.hbm [shape: bf16[128,128], index: 5, kind: input, shape index: {}]
  %s6 = inlined_call_operand.vmem [shape: bf16[1,128], index: 6, kind: input, shape index: {}]
  %s7 = inlined_call_operand.hbm [shape: f32[16,128], index: 7, kind: output, shape index: {}]
  %s8 = sld [smem:[#allocation0]]
  $region54: #{tpu_custom_call.1} parent=0
    _
  %s10 = ssub.s32 1, %s8
  %s11 = scalar_select 0, %s10, %s8
  $region1: #{tpu_custom_call.1} parent=0
    #allocation2 [shape = 'u8[4096]{0}', space=vmem, size = 0x1000, scoped, tag = 'input window, operand 0, single buffered']
    #allocation3 [shape = 's32[1]{0}', space=sflag, size = 0x4, scoped, tag = 'scoped memory for tpu_custom_call.1']
    #allocation4 [shape = 's32[1]{0}', space=sflag, size = 0x4, scoped, tag = 'scoped memory for tpu_custom_call.1']
    #allocation5 [shape = 'u8[32768]{0}', space=vmem, size = 0x8000, scoped, tag = 'input window, operand 1, single buffered']
    #allocation6 [shape = 's32[1]{0}', space=sflag, size = 0x4, scoped, tag = 'scoped memory for tpu_custom_call.1']
    #allocation7 [shape = 'u8[32768]{0}', space=vmem, size = 0x8000, scoped, tag = 'input window, operand 3, single buffered']
    #allocation8 [shape = 'u8[32768]{0}', space=vmem, size = 0x8000, scoped, tag = 'input window, operand 5, single buffered']
    #allocation9 [shape = 's32[1]{0}', space=sflag, size = 0x4, scoped, tag = 'scoped memory for tpu_custom_call.1']
    #allocation10 [shape = 'u8[8192]{0}', space=vmem, size = 0x2000, scoped, tag = 'output window, operand 0, single buffered']
    %12 = vsyncpa [#allocation3], 0
    %13 = vsyncpa [#allocation6], 0
    %14 = vsyncpa [#allocation9], 0
    %15 = vsyncpa [#allocation4], 0
    // Predicated region
    $region2: #{tpu_custom_call.1} parent=1 // pred_check
      _
    $region3: #{tpu_custom_call.1} parent=1 // pred_check_branch
      %17 = sbr.rel (0) target = $region5
    $region4: #{tpu_custom_call.1} parent=1 // pred_region
      %s19 = ssub.s32 128, 128
      %20 = vsyncadd [#allocation3], %s19
      %s21 = sshll.u32 [#allocation2], 4
      %s22 = int_to_ptr.vmem [resolvable:$true] %s21
      %27 = dma.hbm_to_vmem [thread:$0]  %s0, 128, %s22, [#allocation3], 64, 64, 4
    $region5: #{tpu_custom_call.1} parent=1 // pred_fallthru
      _
    // Predicated region
    $region6: #{tpu_custom_call.1} parent=1 // pred_check
      _
    $region7: #{tpu_custom_call.1} parent=1 // pred_check_branch
      %29 = sbr.rel (0) target = $region9
    $region8: #{tpu_custom_call.1} parent=1 // pred_region
      %s31 = ssub.s32 1024, 1024
      %32 = vsyncadd [#allocation6], %s31
      %s33 = sshll.u32 [#allocation5], 4
      %s34 = int_to_ptr.vmem [resolvable:$true] %s33
      %39 = dma.hbm_to_vmem [thread:$0]  %s1, 1024, %s34, [#allocation6], 64, 64, 4
    $region9: #{tpu_custom_call.1} parent=1 // pred_fallthru
      _
    // Predicated region
    $region10: #{tpu_custom_call.1} parent=1 // pred_check
      _
    $region11: #{tpu_custom_call.1} parent=1 // pred_check_branch
      %41 = sbr.rel (0) target = $region13
    $region12: #{tpu_custom_call.1} parent=1 // pred_region
      _
    $region13: #{tpu_custom_call.1} parent=1 // pred_fallthru
      _
    // Predicated region
    $region14: #{tpu_custom_call.1} parent=1 // pred_check
      _
    $region15: #{tpu_custom_call.1} parent=1 // pred_check_branch
      %43 = sbr.rel (0) target = $region17
    $region16: #{tpu_custom_call.1} parent=1 // pred_region
      %s45 = ssub.s32 1024, 1024
      %46 = vsyncadd [#allocation6], %s45
      %s47 = sshll.u32 [#allocation7], 4
      %s48 = int_to_ptr.vmem [resolvable:$true] %s47
      %53 = dma.hbm_to_vmem [thread:$0]  %s3, 1024, %s48, [#allocation6], 64, 64, 4
    $region17: #{tpu_custom_call.1} parent=1 // pred_fallthru
      _
    // Predicated region
    $region18: #{tpu_custom_call.1} parent=1 // pred_check
      _
    $region19: #{tpu_custom_call.1} parent=1 // pred_check_branch
      %55 = sbr.rel (0) target = $region21
    $region20: #{tpu_custom_call.1} parent=1 // pred_region
      _
    $region21: #{tpu_custom_call.1} parent=1 // pred_fallthru
      _
    // Predicated region
    $region22: #{tpu_custom_call.1} parent=1 // pred_check
      _
    $region23: #{tpu_custom_call.1} parent=1 // pred_check_branch
      %57 = sbr.rel (0) target = $region25
    $region24: #{tpu_custom_call.1} parent=1 // pred_region
      %s59 = ssub.s32 1024, 1024
      %60 = vsyncadd [#allocation9], %s59
      %s61 = sshll.u32 [#allocation8], 4
      %s62 = int_to_ptr.vmem [resolvable:$true] %s61
      %67 = dma.hbm_to_vmem [thread:$0]  %s5, 1024, %s62, [#allocation9], 64, 64, 4
    $region25: #{tpu_custom_call.1} parent=1 // pred_fallthru
      _
    // Predicated region
    $region26: #{tpu_custom_call.1} parent=1 // pred_check
      _
    $region27: #{tpu_custom_call.1} parent=1 // pred_check_branch
      %69 = sbr.rel (0) target = $region29
    $region28: #{tpu_custom_call.1} parent=1 // pred_region
      _
    $region29: #{tpu_custom_call.1} parent=1 // pred_fallthru
      _
    // Predicated region
    $region30: #{tpu_custom_call.1} parent=1 // pred_check
      _
    $region31: #{tpu_custom_call.1} parent=1 // pred_check_branch
      %71 = sbr.rel (0) target = $region33
    $region32: #{tpu_custom_call.1} parent=1 // pred_region
      %72 = dma.done [#allocation3], 128
    $region33: #{tpu_custom_call.1} parent=1 // pred_fallthru
      _
    // Predicated region
    $region34: #{tpu_custom_call.1} parent=1 // pred_check
      _
    $region35: #{tpu_custom_call.1} parent=1 // pred_check_branch
      %74 = sbr.rel (0) target = $region37
    $region36: #{tpu_custom_call.1} parent=1 // pred_region
      %75 = dma.done [#allocation6], 1024
    $region37: #{tpu_custom_call.1} parent=1 // pred_fallthru
      _
    // Predicated region
    $region38: #{tpu_custom_call.1} parent=1 // pred_check
      _
    $region39: #{tpu_custom_call.1} parent=1 // pred_check_branch
      %77 = sbr.rel (0) target = $region41
    $region40: #{tpu_custom_call.1} parent=1 // pred_region
      %78 = dma.done [#allocation6], 1024
    $region41: #{tpu_custom_call.1} parent=1 // pred_fallthru
      _
    // Predicated region
    $region42: #{tpu_custom_call.1} parent=1 // pred_check
      _
    $region43: #{tpu_custom_call.1} parent=1 // pred_check_branch
      %80 = sbr.rel (0) target = $region45
    $region44: #{tpu_custom_call.1} parent=1 // pred_region
      %81 = dma.done [#allocation9], 1024
    $region45: #{tpu_custom_call.1} parent=1 // pred_fallthru
      _
    %v83 = vld [vmem:[#allocation2] sm:$0xf]
    %v84 = vld [vmem:[#allocation2 + $0x4] sm:$0xf]
    %v85 = vld [vmem:[#allocation5] sm:$0xf]
    %v86 = vld [vmem:[#allocation5 + $0x4] sm:$0xf]
    %v87 = vld [vmem:[#allocation5 + $0x8] sm:$0xf]
    %v88 = vld [vmem:[#allocation5 + $0xc] sm:$0xf]
    %v89 = vld [vmem:[#allocation5 + $0x10] sm:$0xf]
    %v90 = vld [vmem:[#allocation5 + $0x14] sm:$0xf]
    %v91 = vld [vmem:[#allocation5 + $0x18] sm:$0xf]
    %v92 = vld [vmem:[#allocation5 + $0x1c] sm:$0xf]
    %v93 = vld [vmem:[#allocation5 + $0x20] sm:$0xf]
    %v94 = vld [vmem:[#allocation5 + $0x24] sm:$0xf]
    %v95 = vld [vmem:[#allocation5 + $0x28] sm:$0xf]
    %v96 = vld [vmem:[#allocation5 + $0x2c] sm:$0xf]
    %v97 = vld [vmem:[#allocation5 + $0x30] sm:$0xf]
    %v98 = vld [vmem:[#allocation5 + $0x34] sm:$0xf]
    %v99 = vld [vmem:[#allocation5 + $0x38] sm:$0xf]
    %v100 = vld [vmem:[#allocation5 + $0x3c] sm:$0xf]
    %v101 = vld [vmem:[%s2] sm:$0x1]
    %v102 = vunpack.c.l.bf16 %v101
    %v103 = vlaneseq
    %v104 = vshrl.u32 %v103, 7
    %v105 = vsub.s32 0, %v104
    %v106 = vrot.slane %v102, %v105
    %v109 = vunpack.c.l.b16 %v83
    %v110 = vunpack.c.l.b16 %v84
    %v111 = vpack.c.b16 %v110, %v109
    %v129 = vunpack.c.l.b16 %v85
    %v130 = vunpack.c.l.b16 %v86
    %v131 = vunpack.c.l.b16 %v87
    %v132 = vunpack.c.l.b16 %v88
    %v133 = vunpack.c.l.b16 %v89
    %v134 = vunpack.c.l.b16 %v90
    %v135 = vunpack.c.l.b16 %v91
    %v136 = vunpack.c.l.b16 %v92
    %v137 = vunpack.c.l.b16 %v93
    %v138 = vunpack.c.l.b16 %v94
    %v139 = vunpack.c.l.b16 %v95
    %v140 = vunpack.c.l.b16 %v96
    %v141 = vunpack.c.l.b16 %v97
    %v142 = vunpack.c.l.b16 %v98
    %v143 = vunpack.c.l.b16 %v99
    %v144 = vunpack.c.l.b16 %v100
    %v145 = vpack.c.b16 %v130, %v129
    %v146 = vpack.c.b16 %v132, %v131
    %v147 = vpack.c.b16 %v134, %v133
    %v148 = vpack.c.b16 %v136, %v135
    %v149 = vpack.c.b16 %v138, %v137
    %v150 = vpack.c.b16 %v140, %v139
    %v151 = vpack.c.b16 %v142, %v141
    %v152 = vpack.c.b16 %v144, %v143
    %161 = vmatprep.subr.bf16.mxu0 0
    %162 = vmatpush1.bf16.msra.mxu0 %v152
    %163 = vmatprep.subr.bf16.mxu0 0
    %164 = vmatpush1.bf16.msra.mxu0 %v151
    %165 = vmatprep.subr.bf16.mxu0 0
    %166 = vmatpush1.bf16.msra.mxu0 %v150
    %167 = vmatprep.subr.bf16.mxu0 0
    %168 = vmatpush1.bf16.msra.mxu0 %v149
    %169 = vmatprep.subr.bf16.mxu0 0
    %170 = vmatpush1.bf16.msra.mxu0 %v148
    %171 = vmatprep.subr.bf16.mxu0 0
    %172 = vmatpush1.bf16.msra.mxu0 %v147
    %173 = vmatprep.subr.bf16.mxu0 0
    %174 = vmatpush1.bf16.msra.mxu0 %v146
    %175 = vmatprep.subr.bf16.mxu0 0
    %176 = vmatpush1.bf16.msra.mxu0 %v145
    %177 = vmatprep.subr.bf16.mxu0 0
    %178 = vmatpush2.bf16.msra.mxu0 0
    %179 = vmatprep.subr.bf16.mxu0 0
    %180 = vmatpush2.bf16.msra.mxu0 0
    %181 = vmatprep.subr.bf16.mxu0 0
    %182 = vmatpush2.bf16.msra.mxu0 0
    %183 = vmatprep.subr.bf16.mxu0 0
    %184 = vmatpush2.bf16.msra.mxu0 0
    %185 = vmatprep.subr.bf16.mxu0 0
    %186 = vmatpush2.bf16.msra.mxu0 0
    %187 = vmatprep.subr.bf16.mxu0 0
    %188 = vmatpush2.bf16.msra.mxu0 0
    %189 = vmatprep.subr.bf16.mxu0 0
    %190 = vmatpush2.bf16.msra.mxu0 0
    %191 = vmatprep.subr.bf16.mxu0 0
    %192 = vmatpush2.bf16.msra.mxu0 0
    %193 = vmatprep.mubr.bf16.mxu0 0
    %194 = vmatmul.mubr.bf16.gmra.mxu0 %v111
    %v195 = vpop.f32.mrf.mxu0
    %v196 = vadd.f32 %v106, %v195
    %v197 = vpop.f32.mrf.mxu0
    %v198 = vpop.f32.mrf.mxu0
    %v199 = vadd.f32 %v106, %v198
    %v200 = vpop.f32.mrf.mxu0
    %201 = vdwg.mxu0
    %v202 = vmax.f32 %v196, 0.0
    %v203 = vmax.f32 %v199, 0.0
    %v204 = vpack.c.bf16 %v203, %v202
    %v205 = vld [vmem:[#allocation7] sm:$0xf]
    %v206 = vld [vmem:[#allocation7 + $0x4] sm:$0xf]
    %v207 = vld [vmem:[#allocation7 + $0x8] sm:$0xf]
    %v208 = vld [vmem:[#allocation7 + $0xc] sm:$0xf]
    %v209 = vld [vmem:[#allocation7 + $0x10] sm:$0xf]
    %v210 = vld [vmem:[#allocation7 + $0x14] sm:$0xf]
    %v211 = vld [vmem:[#allocation7 + $0x18] sm:$0xf]
    %v212 = vld [vmem:[#allocation7 + $0x1c] sm:$0xf]
    %v213 = vld [vmem:[#allocation7 + $0x20] sm:$0xf]
    %v214 = vld [vmem:[#allocation7 + $0x24] sm:$0xf]
    %v215 = vld [vmem:[#allocation7 + $0x28] sm:$0xf]
    %v216 = vld [vmem:[#allocation7 + $0x2c] sm:$0xf]
    %v217 = vld [vmem:[#allocation7 + $0x30] sm:$0xf]
    %v218 = vld [vmem:[#allocation7 + $0x34] sm:$0xf]
    %v219 = vld [vmem:[#allocation7 + $0x38] sm:$0xf]
    %v220 = vld [vmem:[#allocation7 + $0x3c] sm:$0xf]
    %v221 = vld [vmem:[%s4] sm:$0x1]
    %v222 = vunpack.c.l.bf16 %v221
    %v223 = vlaneseq
    %v224 = vshrl.u32 %v223, 7
    %v225 = vsub.s32 0, %v224
    %v226 = vrot.slane %v222, %v225
    %v243 = vunpack.c.l.b16 %v205
    %v244 = vunpack.c.l.b16 %v206
    %v245 = vunpack.c.l.b16 %v207
    %v246 = vunpack.c.l.b16 %v208
    %v247 = vunpack.c.l.b16 %v209
    %v248 = vunpack.c.l.b16 %v210
    %v249 = vunpack.c.l.b16 %v211
    %v250 = vunpack.c.l.b16 %v212
    %v251 = vunpack.c.l.b16 %v213
    %v252 = vunpack.c.l.b16 %v214
    %v253 = vunpack.c.l.b16 %v215
    %v254 = vunpack.c.l.b16 %v216
    %v255 = vunpack.c.l.b16 %v217
    %v256 = vunpack.c.l.b16 %v218
    %v257 = vunpack.c.l.b16 %v219
    %v258 = vunpack.c.l.b16 %v220
    %v259 = vpack.c.b16 %v244, %v243
    %v260 = vpack.c.b16 %v246, %v245
    %v261 = vpack.c.b16 %v248, %v247
    %v262 = vpack.c.b16 %v250, %v249
    %v263 = vpack.c.b16 %v252, %v251
    %v264 = vpack.c.b16 %v254, %v253
    %v265 = vpack.c.b16 %v256, %v255
    %v266 = vpack.c.b16 %v258, %v257
    %275 = vmatprep.subr.bf16.mxu0 0
    %276 = vmatpush1.bf16.msra.mxu0 %v266
    %277 = vmatprep.subr.bf16.mxu0 0
    %278 = vmatpush1.bf16.msra.mxu0 %v265
    %279 = vmatprep.subr.bf16.mxu0 0
    %280 = vmatpush1.bf16.msra.mxu0 %v264
    %281 = vmatprep.subr.bf16.mxu0 0
    %282 = vmatpush1.bf16.msra.mxu0 %v263
    %283 = vmatprep.subr.bf16.mxu0 0
    %284 = vmatpush1.bf16.msra.mxu0 %v262
    %285 = vmatprep.subr.bf16.mxu0 0
    %286 = vmatpush1.bf16.msra.mxu0 %v261
    %287 = vmatprep.subr.bf16.mxu0 0
    %288 = vmatpush1.bf16.msra.mxu0 %v260
    %289 = vmatprep.subr.bf16.mxu0 0
    %290 = vmatpush1.bf16.msra.mxu0 %v259
    %291 = vmatprep.subr.bf16.mxu0 0
    %292 = vmatpush2.bf16.msra.mxu0 0
    %293 = vmatprep.subr.bf16.mxu0 0
    %294 = vmatpush2.bf16.msra.mxu0 0
    %295 = vmatprep.subr.bf16.mxu0 0
    %296 = vmatpush2.bf16.msra.mxu0 0
    %297 = vmatprep.subr.bf16.mxu0 0
    %298 = vmatpush2.bf16.msra.mxu0 0
    %299 = vmatprep.subr.bf16.mxu0 0
    %300 = vmatpush2.bf16.msra.mxu0 0
    %301 = vmatprep.subr.bf16.mxu0 0
    %302 = vmatpush2.bf16.msra.mxu0 0
    %303 = vmatprep.subr.bf16.mxu0 0
    %304 = vmatpush2.bf16.msra.mxu0 0
    %305 = vmatprep.subr.bf16.mxu0 0
    %306 = vmatpush2.bf16.msra.mxu0 0
    %307 = vmatprep.mubr.bf16.mxu0 0
    %308 = vmatmul.mubr.bf16.gmra.mxu0 %v204
    %v309 = vpop.f32.mrf.mxu0
    %v310 = vadd.f32 %v226, %v309
    %v311 = vpop.f32.mrf.mxu0
    %v312 = vpop.f32.mrf.mxu0
    %v313 = vadd.f32 %v226, %v312
    %v314 = vpop.f32.mrf.mxu0
    %315 = vdwg.mxu0
    %v316 = vmax.f32 %v310, 0.0
    %v317 = vmax.f32 %v313, 0.0
    %v318 = vpack.c.bf16 %v317, %v316
    %v319 = vld [vmem:[#allocation8] sm:$0xf]
    %v320 = vld [vmem:[#allocation8 + $0x4] sm:$0xf]
    %v321 = vld [vmem:[#allocation8 + $0x8] sm:$0xf]
    %v322 = vld [vmem:[#allocation8 + $0xc] sm:$0xf]
    %v323 = vld [vmem:[#allocation8 + $0x10] sm:$0xf]
    %v324 = vld [vmem:[#allocation8 + $0x14] sm:$0xf]
    %v325 = vld [vmem:[#allocation8 + $0x18] sm:$0xf]
    %v326 = vld [vmem:[#allocation8 + $0x1c] sm:$0xf]
    %v327 = vld [vmem:[#allocation8 + $0x20] sm:$0xf]
    %v328 = vld [vmem:[#allocation8 + $0x24] sm:$0xf]
    %v329 = vld [vmem:[#allocation8 + $0x28] sm:$0xf]
    %v330 = vld [vmem:[#allocation8 + $0x2c] sm:$0xf]
    %v331 = vld [vmem:[#allocation8 + $0x30] sm:$0xf]
    %v332 = vld [vmem:[#allocation8 + $0x34] sm:$0xf]
    %v333 = vld [vmem:[#allocation8 + $0x38] sm:$0xf]
    %v334 = vld [vmem:[#allocation8 + $0x3c] sm:$0xf]
    %v335 = vld [vmem:[%s6] sm:$0x1]
    %v336 = vunpack.c.l.bf16 %v335
    %v337 = vlaneseq
    %v338 = vshrl.u32 %v337, 7
    %v339 = vsub.s32 0, %v338
    %v340 = vrot.slane %v336, %v339
    %v357 = vunpack.c.l.b16 %v319
    %v358 = vunpack.c.l.b16 %v320
    %v359 = vunpack.c.l.b16 %v321
    %v360 = vunpack.c.l.b16 %v322
    %v361 = vunpack.c.l.b16 %v323
    %v362 = vunpack.c.l.b16 %v324
    %v363 = vunpack.c.l.b16 %v325
    %v364 = vunpack.c.l.b16 %v326
    %v365 = vunpack.c.l.b16 %v327
    %v366 = vunpack.c.l.b16 %v328
    %v367 = vunpack.c.l.b16 %v329
    %v368 = vunpack.c.l.b16 %v330
    %v369 = vunpack.c.l.b16 %v331
    %v370 = vunpack.c.l.b16 %v332
    %v371 = vunpack.c.l.b16 %v333
    %v372 = vunpack.c.l.b16 %v334
    %v373 = vpack.c.b16 %v358, %v357
    %v374 = vpack.c.b16 %v360, %v359
    %v375 = vpack.c.b16 %v362, %v361
    %v376 = vpack.c.b16 %v364, %v363
    %v377 = vpack.c.b16 %v366, %v365
    %v378 = vpack.c.b16 %v368, %v367
    %v379 = vpack.c.b16 %v370, %v369
    %v380 = vpack.c.b16 %v372, %v371
    %389 = vmatprep.subr.bf16.mxu0 0
    %390 = vmatpush1.bf16.msra.mxu0 %v380
    %391 = vmatprep.subr.bf16.mxu0 0
    %392 = vmatpush1.bf16.msra.mxu0 %v379
    %393 = vmatprep.subr.bf16.mxu0 0
    %394 = vmatpush1.bf16.msra.mxu0 %v378
    %395 = vmatprep.subr.bf16.mxu0 0
    %396 = vmatpush1.bf16.msra.mxu0 %v377
    %397 = vmatprep.subr.bf16.mxu0 0
    %398 = vmatpush1.bf16.msra.mxu0 %v376
    %399 = vmatprep.subr.bf16.mxu0 0
    %400 = vmatpush1.bf16.msra.mxu0 %v375
    %401 = vmatprep.subr.bf16.mxu0 0
    %402 = vmatpush1.bf16.msra.mxu0 %v374
    %403 = vmatprep.subr.bf16.mxu0 0
    %404 = vmatpush1.bf16.msra.mxu0 %v373
    %405 = vmatprep.subr.bf16.mxu0 0
    %406 = vmatpush2.bf16.msra.mxu0 0
    %407 = vmatprep.subr.bf16.mxu0 0
    %408 = vmatpush2.bf16.msra.mxu0 0
    %409 = vmatprep.subr.bf16.mxu0 0
    %410 = vmatpush2.bf16.msra.mxu0 0
    %411 = vmatprep.subr.bf16.mxu0 0
    %412 = vmatpush2.bf16.msra.mxu0 0
    %413 = vmatprep.subr.bf16.mxu0 0
    %414 = vmatpush2.bf16.msra.mxu0 0
    %415 = vmatprep.subr.bf16.mxu0 0
    %416 = vmatpush2.bf16.msra.mxu0 0
    %417 = vmatprep.subr.bf16.mxu0 0
    %418 = vmatpush2.bf16.msra.mxu0 0
    %419 = vmatprep.subr.bf16.mxu0 0
    %420 = vmatpush2.bf16.msra.mxu0 0
    %421 = vmatprep.mubr.bf16.mxu0 0
    %422 = vmatmul.mubr.bf16.gmra.mxu0 %v318
    %v423 = vpop.f32.mrf.mxu0
    %v424 = vadd.f32 %v340, %v423
    %v425 = vpop.f32.mrf.mxu0
    %v426 = vpop.f32.mrf.mxu0
    %v427 = vadd.f32 %v340, %v426
    %v428 = vpop.f32.mrf.mxu0
    %429 = vdwg.mxu0
    %430 = vst [vmem:[#allocation10] sm:$0xff] %v424
    %431 = vst [vmem:[#allocation10 + $0x8] sm:$0xff] %v427
    // Predicated region
    $region46: #{tpu_custom_call.1} parent=1 // pred_check
      _
    $region47: #{tpu_custom_call.1} parent=1 // pred_check_branch
      %433 = sbr.rel (0) target = $region49
    $region48: #{tpu_custom_call.1} parent=1 // pred_region
      %s435 = ssub.s32 256, 256
      %436 = vsyncadd [#allocation4], %s435
      %s437 = sshll.u32 [#allocation10], 4
      %s438 = int_to_ptr.vmem [resolvable:$true] %s437
      %443 = dma.vmem_to_hbm [thread:$0]  %s438, 256, %s7, [#allocation4], 128, 128, 8
    $region49: #{tpu_custom_call.1} parent=1 // pred_fallthru
      _
    // Predicated region
    $region50: #{tpu_custom_call.1} parent=1 // pred_check
      _
    $region51: #{tpu_custom_call.1} parent=1 // pred_check_branch
      %445 = sbr.rel (0) target = $region53
    $region52: #{tpu_custom_call.1} parent=1 // pred_region
      %446 = dma.done [#allocation4], 256
    $region53: #{tpu_custom_call.1} parent=1 // pred_fallthru
      _
    %447 = vsyncpa [#allocation3], 1
    %448 = vsyncpa [#allocation6], 1
    %449 = vsyncpa [#allocation9], 1
    %450 = vsyncpa [#allocation4], 1

</llo_original>
